<compile_context>
chip_gen: v6e
topology: v6e:2x2x1
jax: 0.10.0
libtpu: 0.0.40
codegen_flags: <defaults>
</compile_context>

<pallas_src>
import jax
import jax.numpy as jnp
from jax.experimental import pallas as pl
from jax.experimental.pallas import tpu as pltpu


def attn_pool_kernel(x_ref, mask_ref, w1_ref, b1_ref, w2_ref, b2_ref, out_ref):
    tb, s, d = x_ref.shape
    d_pad = out_ref.shape[1]

    x = x_ref[...]                                            # (TB, S, D) bf16/f32

    # ---- att_fc1 + tanh: fold (TB, S) into the MXU M dimension ------------
    xm = x.reshape(tb * s, d)                                 # (TB*S, D)
    e = jnp.dot(xm, w1_ref[...], preferred_element_type=jnp.float32)
    e = jnp.tanh(e + b1_ref[...])                             # (TB*S, H2) f32

    # ---- att_fc2 as a VPU multiply + lane reduce on the flat tensor -------
    logits = jnp.sum(e * w2_ref[...], axis=-1, keepdims=True)  # (TB*S, 1)
    logits = logits + b2_ref[0, 0]                             # scalar from SMEM

    # ---- exp -> mask (lane-dense (TB,S) block, tiny in-kernel relayout) ---
    alpha = jnp.exp(logits).reshape(tb, s, 1)                  # (TB, S, 1) f32
    mask3 = mask_ref[...].astype(jnp.float32).reshape(tb, s, 1)
    alpha = alpha * mask3                                      # unnormalized

    # denominator for the deferred normalization
    denom = jnp.sum(alpha, axis=1) + 1e-8                      # (TB, 1) f32

    # ---- pooled[b, d] = sum_s x[b, s, d] * alpha[b, s] ---------------------
    # multiply in x's dtype (bf16 on v6e/v7x), accumulate in f32
    prod = x * alpha.astype(x.dtype)                           # (TB, S, D)
    pooled = jnp.sum(prod, axis=1, dtype=jnp.float32)          # (TB, D) f32

    # deferred normalization: one EUP reciprocal per row, D-wide multiply
    pooled = pooled * pl.reciprocal(denom, approx=True)        # (TB, D)

    if d_pad > d:
        # lane-dense output block: zero the padded lanes (wrapper slices them off)
        out_ref[:, d:] = jnp.zeros((tb, d_pad - d), out_ref.dtype)
        out_ref[:, :d] = pooled.astype(out_ref.dtype)
    else:
        out_ref[...] = pooled.astype(out_ref.dtype)


def attention_pooling(x, attn_mask, w1, b1, w2, b2, *,
                      block_b=None, compute_dtype=jnp.bfloat16):
    B, S, D = x.shape
    H2 = w1.shape[1]
    out_dtype = x.dtype

    if attn_mask is None:
        attn_mask = jnp.ones((B, S), dtype=jnp.float32)
    mask = attn_mask.reshape(B, S).astype(jnp.float32)

    # HBM-byte lever: matmul/pooling inputs in bf16, f32 accumulation in-kernel.
    x_c = x.astype(compute_dtype)
    w1_c = w1.astype(compute_dtype)
    b1_2d = b1.reshape(1, H2).astype(jnp.float32)
    w2_row = w2.reshape(1, H2).astype(jnp.float32)      # dense (1, H2) row
    b2_2d = jnp.asarray(b2, jnp.float32).reshape(1, 1)  # scalar, lives in SMEM

    # Pad S to the sublane pack so in-kernel reshapes are layout no-ops, but
    # only when the padding adds <= ~12.5% extra HBM traffic.  Padded rows get
    # mask=0, so they contribute nothing to the denominator or the pooled sum.
    pack = 16 if compute_dtype == jnp.bfloat16 else 8
    s_pad = ((S + pack - 1) // pack) * pack
    if s_pad != S and (s_pad - S) * 8 > S:
        s_pad = S
    if s_pad != S:
        x_c = jnp.pad(x_c, ((0, 0), (0, s_pad - S), (0, 0)))
        mask = jnp.pad(mask, ((0, 0), (0, s_pad - S)))

    # Lane-dense output: pad D up to a multiple of 128, slice off below.
    d_pad = ((D + 127) // 128) * 128

    # Batch-slab sizing: ~4 MiB of x per grid step; keep >= ~4 slabs when the
    # batch allows it so the "parallel" grid axis feeds both v7x TensorCores.
    if block_b is None:
        per_batch_bytes = s_pad * D * x_c.dtype.itemsize
        block_b = max(1, (4 * 1024 * 1024) // max(per_batch_bytes, 1))
        if B >= 32:
            block_b = min(block_b, B // 4)
    if block_b >= B:
        block_b = B
    else:
        block_b = max(8, (block_b // 8) * 8)   # 8-aligned output sublanes
        if block_b >= B:
            block_b = B

    grid = (pl.cdiv(B, block_b),)

    out_padded = pl.pallas_call(
        attn_pool_kernel,
        out_shape=jax.ShapeDtypeStruct((B, d_pad), out_dtype),
        grid_spec=pltpu.PrefetchScalarGridSpec(
            num_scalar_prefetch=0,
            grid=grid,
            in_specs=[
                pl.BlockSpec((block_b, s_pad, D), lambda i: (i, 0, 0)),  # x slab
                pl.BlockSpec((block_b, s_pad), lambda i: (i, 0)),        # mask (lane-dense)
                pl.BlockSpec((D, H2), lambda i: (0, 0)),                 # W1
                pl.BlockSpec((1, H2), lambda i: (0, 0)),                 # b1
                pl.BlockSpec((1, H2), lambda i: (0, 0)),                 # w2 row
                pl.BlockSpec(memory_space=pltpu.MemorySpace.SMEM),       # b2 scalar
            ],
            out_specs=pl.BlockSpec((block_b, d_pad), lambda i: (i, 0)),
        ),
        compiler_params=pltpu.CompilerParams(
            dimension_semantics=("parallel",),   # batch slabs are independent
            vmem_limit_bytes=48 * 1024 * 1024,   # explicit headroom (v5e default 16 MiB)
        ),
    )(x_c, mask, w1_c, b1_2d, w2_row, b2_2d)

    return out_padded[:, :D] if d_pad != D else out_padded


def reference(x, attn_mask, w1, b1, w2, b2):
    e = jnp.tanh(x @ w1 + b1)                       # (B, S, H2)
    alpha = jnp.exp(e @ w2 + b2)                    # (B, S, 1)
    alpha = alpha * attn_mask[:, :, None]
    alpha = alpha / (jnp.sum(alpha, axis=1, keepdims=True) + 1e-8)
    out = jnp.einsum("bsd,bsj->bdj", x, alpha)      # (B, D, 1)
    return out.reshape(x.shape[0], -1)


if __name__ == "__main__":
    # Small shapes consistent with the module:
    B, S = 2, 8
    d_h = 32            # input feature dim
    hidden_size = 32    # hidden_size // 2 = 16
    H2 = hidden_size // 2

    key = jax.random.PRNGKey(0)
    kx, km, k1, k2, k3, k4 = jax.random.split(key, 6)

    x = jax.random.normal(kx, (B, S, d_h), dtype=jnp.float32)
    # binary attention mask with some zeros to exercise the masking path
    attn_mask = (jax.random.uniform(km, (B, S)) > 0.2).astype(jnp.float32)

    # deterministic "Linear" params, (in, out) layout
    w1 = 0.1 * jax.random.normal(k1, (d_h, H2), dtype=jnp.float32)
    b1 = 0.1 * jax.random.normal(k2, (H2,), dtype=jnp.float32)
    w2 = 0.1 * jax.random.normal(k3, (H2, 1), dtype=jnp.float32)
    b2 = 0.1 * jax.random.normal(k4, (1,), dtype=jnp.float32)

    out = attention_pooling(x, attn_mask, w1, b1, w2, b2)
    out = jax.block_until_ready(out)

    ref = reference(x, attn_mask, w1, b1, w2, b2)
    assert out.shape == (B, d_h), out.shape
    # bf16 x/W1 + approx reciprocal => looser tolerance than the pure-f32 check
    err = jnp.max(jnp.abs(out - ref))
    assert jnp.allclose(out, ref, atol=5e-2, rtol=5e-2), f"mismatch, max err={err}"

    print("KERNEL_OK")
</pallas_src>

<mosaic_0001>
module attributes {stable_mosaic.version = 11 : i64} {
  func.func @attn_pool_kernel(%arg0: i32, %arg1: memref<2x8x32xbf16, #tpu.memory_space<vmem>>, %arg2: memref<2x8xf32, #tpu.memory_space<vmem>>, %arg3: memref<32x16xbf16, #tpu.memory_space<vmem>>, %arg4: memref<1x16xf32, #tpu.memory_space<vmem>>, %arg5: memref<1x16xf32, #tpu.memory_space<vmem>>, %arg6: memref<1x1xf32, #tpu.memory_space<smem>>, %arg7: memref<2x128xf32, #tpu.memory_space<vmem>>) attributes {dimension_semantics = [#tpu.dimension_semantics<parallel>], iteration_bounds = array<i64: 1>, scalar_prefetch = 0 : i64, scratch_operands = 0 : i64, tpu.core_type = #tpu.core_type<tc>, window_params = [{transform_indices = @transform_0, window_bounds = array<i64: 2, 8, 32>}, {transform_indices = @transform_1, window_bounds = array<i64: 2, 8>}, {pipeline_mode = #tpu.pipeline_mode<synchronous>, transform_indices = @transform_2, window_bounds = array<i64: 32, 16>}, {pipeline_mode = #tpu.pipeline_mode<synchronous>, transform_indices = @transform_3, window_bounds = array<i64: 1, 16>}, {pipeline_mode = #tpu.pipeline_mode<synchronous>, transform_indices = @transform_4, window_bounds = array<i64: 1, 16>}, {transform_indices = @transform_5, window_bounds = array<i64: 1, 1>}, {transform_indices = @transform_6, window_bounds = array<i64: 2, 128>}]} {
    %c0 = arith.constant 0 : index
    %c0_0 = arith.constant 0 : index
    %c0_1 = arith.constant 0 : index
    %0 = vector.load %arg1[%c0, %c0_0, %c0_1] : memref<2x8x32xbf16, #tpu.memory_space<vmem>>, vector<2x8x32xbf16>
    %1 = vector.shape_cast %0 : vector<2x8x32xbf16> to vector<16x32xbf16>
    %c0_2 = arith.constant 0 : index
    %c0_3 = arith.constant 0 : index
    %2 = vector.load %arg3[%c0_2, %c0_3] : memref<32x16xbf16, #tpu.memory_space<vmem>>, vector<32x16xbf16>
    %cst = arith.constant dense<0.000000e+00> : vector<16x16xf32>
    %3 = tpu.matmul %1, %2, %cst {dimension_numbers = #tpu.dot_dimension_numbers<[1], [0], [0], [1], [0, 0, 1, 1], [], []>} : vector<16x32xbf16>, vector<32x16xbf16>, vector<16x16xf32> -> vector<16x16xf32>
    %c0_4 = arith.constant 0 : index
    %c0_5 = arith.constant 0 : index
    %4 = vector.load %arg4[%c0_4, %c0_5] : memref<1x16xf32, #tpu.memory_space<vmem>>, vector<1x16xf32>
    %5 = vector.broadcast %4 : vector<1x16xf32> to vector<16x16xf32>
    %6 = arith.addf %3, %5 : vector<16x16xf32>
    %7 = math.tanh %6 : vector<16x16xf32>
    %c0_6 = arith.constant 0 : index
    %c0_7 = arith.constant 0 : index
    %8 = vector.load %arg5[%c0_6, %c0_7] : memref<1x16xf32, #tpu.memory_space<vmem>>, vector<1x16xf32>
    %9 = vector.broadcast %8 : vector<1x16xf32> to vector<16x16xf32>
    %10 = arith.mulf %7, %9 : vector<16x16xf32>
    %cst_8 = arith.constant dense<0.000000e+00> : vector<16xf32>
    %11 = vector.multi_reduction <add>, %10, %cst_8 [1] : vector<16x16xf32> to vector<16xf32>
    %12 = vector.shape_cast %11 : vector<16xf32> to vector<16x1xf32>
    %c0_9 = arith.constant 0 : index
    %c0_10 = arith.constant 0 : index
    %13 = memref.load %arg6[%c0_9, %c0_10] : memref<1x1xf32, #tpu.memory_space<smem>>
    %14 = vector.broadcast %13 : f32 to vector<16x1xf32>
    %15 = arith.addf %12, %14 : vector<16x1xf32>
    %16 = math.exp %15 : vector<16x1xf32>
    %17 = vector.shape_cast %16 : vector<16x1xf32> to vector<2x8x1xf32>
    %c0_11 = arith.constant 0 : index
    %c0_12 = arith.constant 0 : index
    %18 = vector.load %arg2[%c0_11, %c0_12] : memref<2x8xf32, #tpu.memory_space<vmem>>, vector<2x8xf32>
    %19 = vector.shape_cast %18 : vector<2x8xf32> to vector<2x8x1xf32>
    %20 = arith.mulf %17, %19 : vector<2x8x1xf32>
    %cst_13 = arith.constant dense<0.000000e+00> : vector<2x1xf32>
    %21 = vector.multi_reduction <add>, %20, %cst_13 [1] : vector<2x8x1xf32> to vector<2x1xf32>
    %cst_14 = arith.constant 9.99999993E-9 : f32
    %22 = vector.broadcast %cst_14 : f32 to vector<2x1xf32>
    %23 = arith.addf %21, %22 : vector<2x1xf32>
    %24 = arith.truncf %20 : vector<2x8x1xf32> to vector<2x8x1xbf16>
    %25 = vector.broadcast %24 : vector<2x8x1xbf16> to vector<2x8x32xbf16>
    %26 = arith.mulf %0, %25 : vector<2x8x32xbf16>
    %27 = arith.extf %26 : vector<2x8x32xbf16> to vector<2x8x32xf32>
    %cst_15 = arith.constant dense<0.000000e+00> : vector<2x32xf32>
    %28 = vector.multi_reduction <add>, %27, %cst_15 [1] : vector<2x8x32xf32> to vector<2x32xf32>
    %29 = tpu.reciprocal %23 {approx = true} : vector<2x1xf32> -> vector<2x1xf32>
    %30 = vector.broadcast %29 : vector<2x1xf32> to vector<2x32xf32>
    %31 = arith.mulf %28, %30 : vector<2x32xf32>
    %cst_16 = arith.constant 0.000000e+00 : f32
    %32 = vector.broadcast %cst_16 : f32 to vector<2x96xf32>
    %c0_17 = arith.constant 0 : index
    %c32 = arith.constant 32 : index
    %33 = vector.load %arg7[%c0_17, %c32] : memref<2x128xf32, #tpu.memory_space<vmem>>, vector<2x96xf32>
    tpu.vector_store %arg7[%c0_17, %c32], %32 {strides = array<i32>} : memref<2x128xf32, #tpu.memory_space<vmem>>, vector<2x96xf32>,
    %c0_18 = arith.constant 0 : index
    %c0_19 = arith.constant 0 : index
    %34 = vector.load %arg7[%c0_18, %c0_19] : memref<2x128xf32, #tpu.memory_space<vmem>>, vector<2x32xf32>
    tpu.vector_store %arg7[%c0_18, %c0_19], %31 {strides = array<i32>} : memref<2x128xf32, #tpu.memory_space<vmem>>, vector<2x32xf32>,
    return
  }
  func.func @transform_0(%arg0: i32) -> (i32, i32, i32) {
    %c0_i32 = arith.constant 0 : i32
    %c0_i32_0 = arith.constant 0 : i32
    %c0_i32_1 = arith.constant 0 : i32
    return %arg0, %c0_i32, %c0_i32_0 : i32, i32, i32
  }
  func.func @transform_1(%arg0: i32) -> (i32, i32) {
    %c0_i32 = arith.constant 0 : i32
    %c0_i32_0 = arith.constant 0 : i32
    return %arg0, %c0_i32 : i32, i32
  }
  func.func @transform_2(%arg0: i32) -> (i32, i32) {
    %c0_i32 = arith.constant 0 : i32
    %c0_i32_0 = arith.constant 0 : i32
    %c0_i32_1 = arith.constant 0 : i32
    return %c0_i32, %c0_i32_0 : i32, i32
  }
  func.func @transform_3(%arg0: i32) -> (i32, i32) {
    %c0_i32 = arith.constant 0 : i32
    %c0_i32_0 = arith.constant 0 : i32
    %c0_i32_1 = arith.constant 0 : i32
    return %c0_i32, %c0_i32_0 : i32, i32
  }
  func.func @transform_4(%arg0: i32) -> (i32, i32) {
    %c0_i32 = arith.constant 0 : i32
    %c0_i32_0 = arith.constant 0 : i32
    %c0_i32_1 = arith.constant 0 : i32
    return %c0_i32, %c0_i32_0 : i32, i32
  }
  func.func @transform_5(%arg0: i32) -> (i32, i32) {
    %c0_i32 = arith.constant 0 : i32
    %c0_i32_0 = arith.constant 0 : i32
    %c0_i32_1 = arith.constant 0 : i32
    return %c0_i32, %c0_i32_0 : i32, i32
  }
  func.func @transform_6(%arg0: i32) -> (i32, i32) {
    %c0_i32 = arith.constant 0 : i32
    %c0_i32_0 = arith.constant 0 : i32
    return %arg0, %c0_i32 : i32, i32
  }
}

</mosaic_0001>

<llo_original>
// kernel: tpu_custom_call.1
$region0: #{tpu_custom_call.1}
  #allocation0 [shape = 'u32[]', space=smem, size = 0x4, offset = 0x4, fixed_abs, tag = 'smem constant byte address 0x4 - core index']
  #allocation1 [shape = 'u32[144,128]{1,0:T(1,128)}', space=vmem, size = 0x12000, scoped, tag = 'internal scratch']
  #allocation2 [shape = 'f32[1,1]{1,0:T(1,128)S(6)}', space=smem, size = 0x200, scoped, tag = 'scoped memory for tpu_custom_call.1']
  %s0 = inlined_call_operand.vmem [shape: bf16[2,8,32], index: 0, kind: input, shape index: {}]
  %s1 = inlined_call_operand.vmem [shape: f32[2,8], index: 1, kind: input, shape index: {}]
  %s2 = inlined_call_operand.vmem [shape: bf16[32,16], index: 2, kind: input, shape index: {}]
  %s3 = inlined_call_operand.vmem [shape: f32[1,16], index: 3, kind: input, shape index: {}]
  %s4 = inlined_call_operand.vmem [shape: f32[1,16], index: 4, kind: input, shape index: {}]
  %s5 = inlined_call_operand.<no memory space> [shape: f32[1,1], index: 5, kind: input, shape index: {}]
  %s6 = inlined_call_operand.hbm [shape: f32[2,128], index: 6, kind: output, shape index: {}]
  %s7 = sld [smem:[#allocation0]]
  $region34: #{tpu_custom_call.1} parent=0
    _
  %s9 = ssub.s32 1, %s7
  %s10 = scalar_select 0, %s9, %s7
  %11 = sst [smem:[#allocation2]] %s5
  $region1: #{tpu_custom_call.1} parent=0
    #allocation3 [shape = 'u8[1024]{0}', space=vmem, size = 0x400, scoped, tag = 'output window, operand 0, single buffered']
    #allocation4 [shape = 's32[1]{0}', space=sflag, size = 0x4, scoped, tag = 'scoped memory for tpu_custom_call.1']
    %12 = vsyncpa [#allocation4], 0
    // Predicated region
    $region2: #{tpu_custom_call.1} parent=1 // pred_check
      _
    $region3: #{tpu_custom_call.1} parent=1 // pred_check_branch
      %14 = sbr.rel (0) target = $region5
    $region4: #{tpu_custom_call.1} parent=1 // pred_region
      _
    $region5: #{tpu_custom_call.1} parent=1 // pred_fallthru
      _
    // Predicated region
    $region6: #{tpu_custom_call.1} parent=1 // pred_check
      _
    $region7: #{tpu_custom_call.1} parent=1 // pred_check_branch
      %16 = sbr.rel (0) target = $region9
    $region8: #{tpu_custom_call.1} parent=1 // pred_region
      _
    $region9: #{tpu_custom_call.1} parent=1 // pred_fallthru
      _
    // Predicated region
    $region10: #{tpu_custom_call.1} parent=1 // pred_check
      _
    $region11: #{tpu_custom_call.1} parent=1 // pred_check_branch
      %18 = sbr.rel (0) target = $region13
    $region12: #{tpu_custom_call.1} parent=1 // pred_region
      _
    $region13: #{tpu_custom_call.1} parent=1 // pred_fallthru
      _
    // Predicated region
    $region14: #{tpu_custom_call.1} parent=1 // pred_check
      _
    $region15: #{tpu_custom_call.1} parent=1 // pred_check_branch
      %20 = sbr.rel (0) target = $region17
    $region16: #{tpu_custom_call.1} parent=1 // pred_region
      _
    $region17: #{tpu_custom_call.1} parent=1 // pred_fallthru
      _
    // Predicated region
    $region18: #{tpu_custom_call.1} parent=1 // pred_check
      _
    $region19: #{tpu_custom_call.1} parent=1 // pred_check_branch
      %22 = sbr.rel (0) target = $region21
    $region20: #{tpu_custom_call.1} parent=1 // pred_region
      _
    $region21: #{tpu_custom_call.1} parent=1 // pred_fallthru
      _
    // Predicated region
    $region22: #{tpu_custom_call.1} parent=1 // pred_check
      _
    $region23: #{tpu_custom_call.1} parent=1 // pred_check_branch
      %24 = sbr.rel (0) target = $region25
    $region24: #{tpu_custom_call.1} parent=1 // pred_region
      _
    $region25: #{tpu_custom_call.1} parent=1 // pred_fallthru
      _
    %v26 = vld [vmem:[%s0] sm:$0xf]
    %v27 = vld [vmem:[%s0 + $0x4] sm:$0xf]
    %v28 = vld [vmem:[%s2] sm:$0xf]
    %v29 = vld [vmem:[%s2 + $0x4] sm:$0xf]
    %v30 = vld [vmem:[%s2 + $0x8] sm:$0xf]
    %v31 = vld [vmem:[%s2 + $0xc] sm:$0xf]
    %v32 = vld [vmem:[%s3] sm:$0x1]
    %v34 = vlaneseq
    %v35 = vshrl.u32 %v34, 7
    %v36 = vsub.s32 0, %v35
    %v37 = vrot.slane %v32, %v36
    %v41 = vunpack.c.l.b16 %v26
    %v42 = vunpack.c.l.b16 %v27
    %v43 = vpack.c.b16 %v42, %v41
    %v48 = vunpack.c.l.b16 %v28
    %v49 = vunpack.c.l.b16 %v29
    %v50 = vunpack.c.l.b16 %v30
    %v51 = vunpack.c.l.b16 %v31
    %v52 = vpack.c.b16 %v49, %v48
    %v53 = vpack.c.b16 %v51, %v50
    %vm56 = vcmask 261120
    %v58 = vsel %vm56, %v43, 0
    %60 = vmatprep.subr.bf16.mxu0 0
    %61 = vmatpush1.bf16.msra.mxu0 0
    %62 = vmatprep.subr.bf16.mxu0 0
    %63 = vmatpush1.bf16.msra.mxu0 0
    %64 = vmatprep.subr.bf16.mxu0 0
    %65 = vmatpush1.bf16.msra.mxu0 0
    %66 = vmatprep.subr.bf16.mxu0 0
    %67 = vmatpush1.bf16.msra.mxu0 0
    %68 = vmatprep.subr.bf16.mxu0 0
    %69 = vmatpush1.bf16.msra.mxu0 0
    %70 = vmatprep.subr.bf16.mxu0 0
    %71 = vmatpush1.bf16.msra.mxu0 0
    %72 = vmatprep.subr.bf16.mxu0 0
    %73 = vmatpush1.bf16.msra.mxu0 %v53
    %74 = vmatprep.subr.bf16.mxu0 0
    %75 = vmatpush1.bf16.msra.mxu0 %v52
    %76 = vmatprep.subr.bf16.mxu0 0
    %77 = vmatpush2.bf16.msra.mxu0 0
    %78 = vmatprep.subr.bf16.mxu0 0
    %79 = vmatpush2.bf16.msra.mxu0 0
    %80 = vmatprep.subr.bf16.mxu0 0
    %81 = vmatpush2.bf16.msra.mxu0 0
    %82 = vmatprep.subr.bf16.mxu0 0
    %83 = vmatpush2.bf16.msra.mxu0 0
    %84 = vmatprep.subr.bf16.mxu0 0
    %85 = vmatpush2.bf16.msra.mxu0 0
    %86 = vmatprep.subr.bf16.mxu0 0
    %87 = vmatpush2.bf16.msra.mxu0 0
    %88 = vmatprep.subr.bf16.mxu0 0
    %89 = vmatpush2.bf16.msra.mxu0 0
    %90 = vmatprep.subr.bf16.mxu0 0
    %91 = vmatpush2.bf16.msra.mxu0 0
    %92 = vmatprep.mubr.bf16.mxu0 0
    %93 = vmatmul.mubr.bf16.gmra.mxu0 %v58
    %v94 = vpop.f32.mrf.mxu0
    %v95 = vadd.f32 %v37, %v94
    %v96 = vpop.f32.mrf.mxu0
    %v97 = vpop.f32.mrf.mxu0
    %v98 = vadd.f32 %v37, %v97
    %v99 = vpop.f32.mrf.mxu0
    %100 = vdwg.mxu0
    %v101 = vtanh.pop %v95
    %v102 = vtanh.pop %v98
    %v103 = vld [vmem:[%s4] sm:$0x1]
    %v105 = vlaneseq
    %v106 = vshrl.u32 %v105, 7
    %v107 = vsub.s32 0, %v106
    %v108 = vrot.slane %v103, %v107
    %v110 = vmul.f32 %v101, %v108
    %v111 = vmul.f32 %v102, %v108
    %vm112 = vcmask 130048
    %v113 = vsel %vm112, %v110, 0.0
    %114 = vadd.xlane.f32.xlu0 %v113
    %v115 = vpop.xlane.xlu0 %114
    %v116 = vsel %vm112, %v111, 0.0
    %117 = vadd.xlane.f32.xlu0 %v116
    %v118 = vpop.xlane.xlu0 %117
    %s119 = sld [smem:[#allocation2]]
    %v120 = vstv %s119
    %v121 = vadd.f32 %v115, %v120
    %v122 = vadd.f32 %v118, %v120
    %v123 = vmul.f32 %v121, 1.442695
    %v124 = vpow.pop %v123
    %v125 = vmul.f32 %v122, 1.442695
    %v126 = vpow.pop %v125
    %v127 = vld [vmem:[%s1] sm:$0x3]
    %v128 = vlaneseq
    %v129 = vshrl.u32 %v128, 7
    %v130 = vsub.s32 0, %v129
    %v131 = vrot.slane %v127, %v130
    %133 = vbcast.lane.b32.xlu0 %v131, 256
    %v134 = vpop.permute.xlu0 %133
    %v135 = vlaneseq
    %v136 = vshrl.u32 %v135, 7
    %v137 = vsub.s32 1, %v136
    %v138 = vrot.slane %v127, %v137
    %140 = vbcast.lane.b32.xlu0 %v138, 256
    %v141 = vpop.permute.xlu0 %140
    %v142 = vmul.f32 %v124, %v134
    %v143 = vmul.f32 %v126, %v141
    %v144 = vrot.slane %v142, 4
    %v145 = vadd.f32 %v142, %v144
    %v146 = vrot.slane %v145, 2
    %v147 = vadd.f32 %v145, %v146
    %v148 = vrot.slane %v147, 1
    %v149 = vadd.f32 %v147, %v148
    %v150 = vrot.slane %v143, 4
    %v151 = vadd.f32 %v143, %v150
    %v152 = vrot.slane %v151, 2
    %v153 = vadd.f32 %v151, %v152
    %v154 = vrot.slane %v153, 1
    %v155 = vadd.f32 %v153, %v154
    %v156 = vadd.f32 %v149, 1e-08
    %v157 = vadd.f32 %v155, 1e-08
    %v158 = vpack.c.bf16 %v142, %v142
    %v159 = vpack.c.bf16 %v143, %v143
    %v160 = vmul.bf16 %v26, %v158
    %v161 = vmul.bf16 %v27, %v159
    %v162 = vunpack.c.l.bf16 %v160
    %v163 = vunpack.c.l.bf16 %v161
    %v164 = vsel %vm56, %v162, 0.0
    %v165 = vrot.slane %v164, 4
    %v166 = vadd.f32 %v164, %v165
    %v167 = vrot.slane %v166, 2
    %v168 = vadd.f32 %v166, %v167
    %v169 = vrot.slane %v168, 1
    %v170 = vadd.f32 %v168, %v169
    %v171 = vsel %vm56, %v163, 0.0
    %v172 = vrot.slane %v171, 4
    %v173 = vadd.f32 %v171, %v172
    %v174 = vrot.slane %v173, 2
    %v175 = vadd.f32 %v173, %v174
    %v176 = vrot.slane %v175, 1
    %v177 = vadd.f32 %v175, %v176
    %v178 = vrcp.pop %v156
    %v179 = vrcp.pop %v157
    %v180 = vmul.f32 %v170, %v178
    %v181 = vmul.f32 %v177, %v179
    %vm182 = vcmask 1041664
    %183 = vst.msk [vmem:[#allocation3] sm:$0x3] %vm182, 0.0
    %vm186 = vcmask 1041409
    %v187 = vsel %vm186, %v181, %v180
    %vm189 = vcmask 254976
    %190 = vst.msk [vmem:[#allocation3] sm:$0x3] %vm189, %v187
    // Predicated region
    $region26: #{tpu_custom_call.1} parent=1 // pred_check
      _
    $region27: #{tpu_custom_call.1} parent=1 // pred_check_branch
      %192 = sbr.rel (0) target = $region29
    $region28: #{tpu_custom_call.1} parent=1 // pred_region
      %s194 = ssub.s32 32, 32
      %195 = vsyncadd [#allocation4], %s194
      %s197 = sshll.u32 [#allocation3], 4
      %s198 = int_to_ptr.vmem [resolvable:$true] %s197
      %200 = dma.vmem_to_hbm [thread:$0]  %s198, 32, %s6, [#allocation4]
    $region29: #{tpu_custom_call.1} parent=1 // pred_fallthru
      _
    // Predicated region
    $region30: #{tpu_custom_call.1} parent=1 // pred_check
      _
    $region31: #{tpu_custom_call.1} parent=1 // pred_check_branch
      %202 = sbr.rel (0) target = $region33
    $region32: #{tpu_custom_call.1} parent=1 // pred_region
      %203 = dma.done [#allocation4], 32
    $region33: #{tpu_custom_call.1} parent=1 // pred_fallthru
      _
    %204 = vsyncpa [#allocation4], 1

</llo_original>
